<compile_context>
chip_gen: v7x
topology: tpu7x:2x2x1
jax: 0.10.0
libtpu: 0.0.40
codegen_flags: <defaults>
</compile_context>

<pallas_src>
import functools

import jax
import jax.numpy as jnp
from jax.experimental import pallas as pl
from jax.experimental.pallas import tpu as pltpu

LANE = 128  # vreg lane width -- pad layer output widths to this


def _round_up(x, m):
    return (x + m - 1) // m * m


def _mlp_fused_kernel(*refs, num_layers, use_bf16):
    """Fused MLP forward.

    refs layout:
      refs[0]                       x_ref  [B, Din]        f32 (unpadded)
      refs[1 : 1+L]                 w_refs [Ki, Nip]        bf16 (or f32), zero-padded cols/rows
      refs[1+L : 1+2L]              b_refs [1, Nip]         f32, zero-padded
      refs[1+2L]                    o_ref  [B, Nout_pad]    f32
    """
    x_ref = refs[0]
    w_refs = refs[1:1 + num_layers]
    b_refs = refs[1 + num_layers:1 + 2 * num_layers]
    o_ref = refs[1 + 2 * num_layers]

    h = x_ref[...].astype(jnp.float32)               # activations stay in VMEM/vregs
    for l in range(num_layers):                      # static unroll over layers
        w = w_refs[l][...]                           # already bf16 at rest (no per-call cast)
        b = b_refs[l][...]                           # f32, [1, Nip]
        lhs = h.astype(jnp.bfloat16) if use_bf16 else h
        y = jnp.dot(lhs, w, preferred_element_type=jnp.float32)   # MXU, f32 accumulate
        h = jnp.maximum(y + b, 0.0)                  # bias + ReLU epilogue in f32
    o_ref[...] = h.astype(o_ref.dtype)               # lane-dense (padded-to-128) store


def make_mlp_fn(params, in_features, use_bf16=True):
    """Pack parameters once (per-layer zero-padding, bf16 weights at rest when
    use_bf16) and return a jitted forward x -> MLP(x) running as one Pallas
    kernel."""
    num_layers = len(params)
    w_dtype = jnp.bfloat16 if use_bf16 else jnp.float32

    w_list, b_list = [], []
    for l, (w, b) in enumerate(params):
        fi, fo = w.shape
        # Layer 0 keeps its true K (x is unpadded); later layers' K equals the
        # previous layer's padded output width.
        rows = fi if l == 0 else _round_up(fi, LANE)
        cols = _round_up(fo, LANE)
        w_p = jnp.zeros((rows, cols), w_dtype).at[:fi, :fo].set(w.astype(w_dtype))
        b_p = jnp.zeros((1, cols), jnp.float32).at[0, :fo].set(b.astype(jnp.float32))
        w_list.append(w_p)
        b_list.append(b_p)

    out_features = params[-1][0].shape[1]
    out_pad = _round_up(out_features, LANE)
    max_width = max([in_features] + [wp.shape[1] for wp in w_list])
    param_bytes = sum(int(a.size) * a.dtype.itemsize for a in w_list + b_list)

    kernel = functools.partial(
        _mlp_fused_kernel, num_layers=num_layers, use_bf16=use_bf16)

    @jax.jit
    def forward(x):
        B, Din = x.shape
        assert Din == in_features, (Din, in_features)

        # Size the scoped VMEM limit from what is actually resident.
        act_bytes = 4 * B * (Din + 2 * max_width + out_pad)
        vmem_limit = int(1.5 * (param_bytes + act_bytes)) + (1 << 20)
        vmem_limit = max(min(vmem_limit, 64 * 1024 * 1024), 4 * 1024 * 1024)

        out_padded = pl.pallas_call(
            kernel,
            out_shape=jax.ShapeDtypeStruct((B, out_pad), jnp.float32),
            # Gridless: whole (small) operand set resident in VMEM, no pipeline.
            in_specs=[pl.BlockSpec(memory_space=pltpu.MemorySpace.VMEM)]
                     * (1 + 2 * num_layers),
            out_specs=pl.BlockSpec(memory_space=pltpu.MemorySpace.VMEM),
            compiler_params=pltpu.CompilerParams(vmem_limit_bytes=vmem_limit),
        )(x.astype(jnp.float32), *w_list, *b_list)

        return out_padded[:, :out_features].astype(x.dtype)

    return forward


def init_mlp_params(key, in_channels, sizes, dtype=jnp.float32):
    """Deterministic init matching PyTorch nn.Linear's default
    (uniform(-1/sqrt(fan_in), 1/sqrt(fan_in)) for weight and bias)."""
    params = []
    dims = [in_channels] + list(sizes)
    for i in range(len(sizes)):
        fan_in, fan_out = dims[i], dims[i + 1]
        key, kw, kb = jax.random.split(key, 3)
        bound = 1.0 / jnp.sqrt(jnp.array(fan_in, dtype=dtype))
        w = jax.random.uniform(kw, (fan_in, fan_out), dtype=dtype,
                               minval=-bound, maxval=bound)
        b = jax.random.uniform(kb, (fan_out,), dtype=dtype,
                               minval=-bound, maxval=bound)
        params.append((w, b))
    return params


if __name__ == "__main__":
    key = jax.random.PRNGKey(0)

    batch = 8
    in_channels = 32
    sizes = (64, 32, 16)

    key, kx, kp = jax.random.split(key, 3)
    x = jax.random.normal(kx, (batch, in_channels), dtype=jnp.float32)
    params = init_mlp_params(kp, in_channels, sizes)

    # bf16-MXU fused kernel (default fast path, bf16 weights at rest).
    mlp_bf16 = make_mlp_fn(params, in_channels, use_bf16=True)
    out = jax.block_until_ready(mlp_bf16(x))
    assert out.shape == (batch, sizes[-1])

    # Pure-JAX references (MLP spec: ReLU after every Linear, incl. the last).
    ref_f32 = x
    ref_bf16 = x
    for w, b in params:
        ref_f32 = jnp.maximum(ref_f32 @ w + b, 0.0)
        ref_bf16 = jnp.maximum(
            jnp.dot(ref_bf16.astype(jnp.bfloat16), w.astype(jnp.bfloat16),
                    preferred_element_type=jnp.float32) + b, 0.0)

    # Kernel matches the bf16-matmul reference tightly, and the f32 module
    # semantics to bf16 precision.
    assert jnp.allclose(out, ref_bf16, atol=1e-4, rtol=1e-4)
    assert jnp.allclose(out, ref_f32, atol=5e-2, rtol=5e-2)

    # Exact-semantics f32 path also available and checked.
    mlp_f32 = make_mlp_fn(params, in_channels, use_bf16=False)
    out_f32 = jax.block_until_ready(mlp_f32(x))
    assert jnp.allclose(out_f32, ref_f32, atol=1e-5, rtol=1e-5)

    print("KERNEL_OK")
</pallas_src>

<mosaic_0001>
module attributes {stable_mosaic.version = 11 : i64} {
  func.func @_mlp_fused_kernel(%arg0: memref<8x32xf32, #tpu.memory_space<vmem>>, %arg1: memref<32x128xbf16, #tpu.memory_space<vmem>>, %arg2: memref<128x128xbf16, #tpu.memory_space<vmem>>, %arg3: memref<128x128xbf16, #tpu.memory_space<vmem>>, %arg4: memref<1x128xf32, #tpu.memory_space<vmem>>, %arg5: memref<1x128xf32, #tpu.memory_space<vmem>>, %arg6: memref<1x128xf32, #tpu.memory_space<vmem>>, %arg7: memref<8x128xf32, #tpu.memory_space<vmem>>) attributes {dimension_semantics = [], scalar_prefetch = 0 : i64, scratch_operands = 0 : i64, tpu.core_type = #tpu.core_type<tc>} {
    %c0 = arith.constant 0 : index
    %c0_0 = arith.constant 0 : index
    %0 = vector.load %arg0[%c0, %c0_0] : memref<8x32xf32, #tpu.memory_space<vmem>>, vector<8x32xf32>
    %c0_1 = arith.constant 0 : index
    %c0_2 = arith.constant 0 : index
    %1 = vector.load %arg1[%c0_1, %c0_2] : memref<32x128xbf16, #tpu.memory_space<vmem>>, vector<32x128xbf16>
    %c0_3 = arith.constant 0 : index
    %c0_4 = arith.constant 0 : index
    %2 = vector.load %arg4[%c0_3, %c0_4] : memref<1x128xf32, #tpu.memory_space<vmem>>, vector<1x128xf32>
    %3 = arith.truncf %0 : vector<8x32xf32> to vector<8x32xbf16>
    %cst = arith.constant dense<0.000000e+00> : vector<8x128xf32>
    %4 = tpu.matmul %3, %1, %cst {dimension_numbers = #tpu.dot_dimension_numbers<[1], [0], [0], [1], [0, 0, 1, 1], [], []>} : vector<8x32xbf16>, vector<32x128xbf16>, vector<8x128xf32> -> vector<8x128xf32>
    %5 = vector.broadcast %2 : vector<1x128xf32> to vector<8x128xf32>
    %6 = arith.addf %4, %5 : vector<8x128xf32>
    %cst_5 = arith.constant 0.000000e+00 : f32
    %7 = vector.broadcast %cst_5 : f32 to vector<8x128xf32>
    %8 = arith.maximumf %6, %7 : vector<8x128xf32>
    %c0_6 = arith.constant 0 : index
    %c0_7 = arith.constant 0 : index
    %9 = vector.load %arg2[%c0_6, %c0_7] : memref<128x128xbf16, #tpu.memory_space<vmem>>, vector<128x128xbf16>
    %c0_8 = arith.constant 0 : index
    %c0_9 = arith.constant 0 : index
    %10 = vector.load %arg5[%c0_8, %c0_9] : memref<1x128xf32, #tpu.memory_space<vmem>>, vector<1x128xf32>
    %11 = arith.truncf %8 : vector<8x128xf32> to vector<8x128xbf16>
    %cst_10 = arith.constant dense<0.000000e+00> : vector<8x128xf32>
    %12 = tpu.matmul %11, %9, %cst_10 {dimension_numbers = #tpu.dot_dimension_numbers<[1], [0], [0], [1], [0, 0, 1, 1], [], []>} : vector<8x128xbf16>, vector<128x128xbf16>, vector<8x128xf32> -> vector<8x128xf32>
    %13 = vector.broadcast %10 : vector<1x128xf32> to vector<8x128xf32>
    %14 = arith.addf %12, %13 : vector<8x128xf32>
    %cst_11 = arith.constant 0.000000e+00 : f32
    %15 = vector.broadcast %cst_11 : f32 to vector<8x128xf32>
    %16 = arith.maximumf %14, %15 : vector<8x128xf32>
    %c0_12 = arith.constant 0 : index
    %c0_13 = arith.constant 0 : index
    %17 = vector.load %arg3[%c0_12, %c0_13] : memref<128x128xbf16, #tpu.memory_space<vmem>>, vector<128x128xbf16>
    %c0_14 = arith.constant 0 : index
    %c0_15 = arith.constant 0 : index
    %18 = vector.load %arg6[%c0_14, %c0_15] : memref<1x128xf32, #tpu.memory_space<vmem>>, vector<1x128xf32>
    %19 = arith.truncf %16 : vector<8x128xf32> to vector<8x128xbf16>
    %cst_16 = arith.constant dense<0.000000e+00> : vector<8x128xf32>
    %20 = tpu.matmul %19, %17, %cst_16 {dimension_numbers = #tpu.dot_dimension_numbers<[1], [0], [0], [1], [0, 0, 1, 1], [], []>} : vector<8x128xbf16>, vector<128x128xbf16>, vector<8x128xf32> -> vector<8x128xf32>
    %21 = vector.broadcast %18 : vector<1x128xf32> to vector<8x128xf32>
    %22 = arith.addf %20, %21 : vector<8x128xf32>
    %cst_17 = arith.constant 0.000000e+00 : f32
    %23 = vector.broadcast %cst_17 : f32 to vector<8x128xf32>
    %24 = arith.maximumf %22, %23 : vector<8x128xf32>
    %c0_18 = arith.constant 0 : index
    %c0_19 = arith.constant 0 : index
    %25 = vector.load %arg7[%c0_18, %c0_19] : memref<8x128xf32, #tpu.memory_space<vmem>>, vector<8x128xf32>
    tpu.vector_store %arg7[%c0_18, %c0_19], %24 {strides = array<i32>} : memref<8x128xf32, #tpu.memory_space<vmem>>, vector<8x128xf32>,
    return
  }
}

</mosaic_0001>

<llo_original>
// kernel: forward.1
$region0: #{forward.1}
  #allocation0 [shape = 'u32[]', space=smem, size = 0x4, offset = 0x4, fixed_abs, tag = 'smem constant byte address 0x4 - core index']
  #allocation1 [shape = 'u32[144,128]{1,0:T(1,128)}', space=vmem, size = 0x12000, scoped, tag = 'internal scratch']
  %s0 = inlined_call_operand.vmem [shape: f32[8,32], index: 0, kind: input, shape index: {}]
  %s1 = inlined_call_operand.vmem [shape: bf16[32,128], index: 1, kind: input, shape index: {}]
  %s2 = inlined_call_operand.hbm [shape: bf16[128,128], index: 2, kind: input, shape index: {}]
  %s3 = inlined_call_operand.hbm [shape: bf16[128,128], index: 3, kind: input, shape index: {}]
  %s4 = inlined_call_operand.hbm [shape: f32[1,128], index: 4, kind: input, shape index: {}]
  %s5 = inlined_call_operand.vmem [shape: f32[1,128], index: 5, kind: input, shape index: {}]
  %s6 = inlined_call_operand.vmem [shape: f32[1,128], index: 6, kind: input, shape index: {}]
  %s7 = inlined_call_operand.hbm [shape: f32[8,128], index: 7, kind: output, shape index: {}]
  %s8 = sld [smem:[#allocation0]]
  $region50: #{forward.1} parent=0
    _
  %s10 = ssub.s32 1, %s8
  %s11 = scalar_select 0, %s10, %s8
  $region1: #{forward.1} parent=0
    #allocation2 [shape = 'u8[32768]{0}', space=vmem, size = 0x8000, scoped, tag = 'input window, operand 2, single buffered']
    #allocation3 [shape = 's32[1]{0}', space=sflag, size = 0x4, scoped, tag = 'scoped memory for forward.1']
    #allocation4 [shape = 's32[1]{0}', space=sflag, size = 0x4, scoped, tag = 'scoped memory for forward.1']
    #allocation5 [shape = 'u8[32768]{0}', space=vmem, size = 0x8000, scoped, tag = 'input window, operand 3, single buffered']
    #allocation6 [shape = 's32[1]{0}', space=sflag, size = 0x4, scoped, tag = 'scoped memory for forward.1']
    #allocation7 [shape = 'u8[512]{0}', space=vmem, size = 0x400, scoped, tag = 'input window, operand 4, single buffered']
    #allocation8 [shape = 'u8[4096]{0}', space=vmem, size = 0x1000, scoped, tag = 'output window, operand 0, single buffered']
    %12 = vsyncpa [#allocation3], 0
    %13 = vsyncpa [#allocation6], 0
    %14 = vsyncpa [#allocation4], 0
    // Predicated region
    $region2: #{forward.1} parent=1 // pred_check
      _
    $region3: #{forward.1} parent=1 // pred_check_branch
      %16 = sbr.rel (0) target = $region5
    $region4: #{forward.1} parent=1 // pred_region
      _
    $region5: #{forward.1} parent=1 // pred_fallthru
      _
    // Predicated region
    $region6: #{forward.1} parent=1 // pred_check
      _
    $region7: #{forward.1} parent=1 // pred_check_branch
      %18 = sbr.rel (0) target = $region9
    $region8: #{forward.1} parent=1 // pred_region
      _
    $region9: #{forward.1} parent=1 // pred_fallthru
      _
    // Predicated region
    $region10: #{forward.1} parent=1 // pred_check
      _
    $region11: #{forward.1} parent=1 // pred_check_branch
      %20 = sbr.rel (0) target = $region13
    $region12: #{forward.1} parent=1 // pred_region
      %s22 = ssub.s32 1024, 1024
      %23 = vsyncadd [#allocation3], %s22
      %s24 = sshll.u32 [#allocation2], 4
      %s25 = int_to_ptr.vmem [resolvable:$true] %s24
      %30 = dma.hbm_to_vmem [thread:$0]  %s2, 1024, %s25, [#allocation3], 64, 64, 4
    $region13: #{forward.1} parent=1 // pred_fallthru
      _
    // Predicated region
    $region14: #{forward.1} parent=1 // pred_check
      _
    $region15: #{forward.1} parent=1 // pred_check_branch
      %32 = sbr.rel (0) target = $region17
    $region16: #{forward.1} parent=1 // pred_region
      %s34 = ssub.s32 1024, 1024
      %35 = vsyncadd [#allocation6], %s34
      %s36 = sshll.u32 [#allocation5], 4
      %s37 = int_to_ptr.vmem [resolvable:$true] %s36
      %42 = dma.hbm_to_vmem [thread:$0]  %s3, 1024, %s37, [#allocation6], 64, 64, 4
    $region17: #{forward.1} parent=1 // pred_fallthru
      _
    // Predicated region
    $region18: #{forward.1} parent=1 // pred_check
      _
    $region19: #{forward.1} parent=1 // pred_check_branch
      %44 = sbr.rel (0) target = $region21
    $region20: #{forward.1} parent=1 // pred_region
      %s46 = ssub.s32 16, 16
      %47 = vsyncadd [#allocation6], %s46
      %s49 = sshll.u32 [#allocation7], 4
      %s50 = int_to_ptr.vmem [resolvable:$true] %s49
      %52 = dma.hbm_to_vmem [thread:$0]  %s4, 16, %s50, [#allocation6]
    $region21: #{forward.1} parent=1 // pred_fallthru
      _
    // Predicated region
    $region22: #{forward.1} parent=1 // pred_check
      _
    $region23: #{forward.1} parent=1 // pred_check_branch
      %54 = sbr.rel (0) target = $region25
    $region24: #{forward.1} parent=1 // pred_region
      _
    $region25: #{forward.1} parent=1 // pred_fallthru
      _
    // Predicated region
    $region26: #{forward.1} parent=1 // pred_check
      _
    $region27: #{forward.1} parent=1 // pred_check_branch
      %56 = sbr.rel (0) target = $region29
    $region28: #{forward.1} parent=1 // pred_region
      _
    $region29: #{forward.1} parent=1 // pred_fallthru
      _
    // Predicated region
    $region30: #{forward.1} parent=1 // pred_check
      _
    $region31: #{forward.1} parent=1 // pred_check_branch
      %58 = sbr.rel (0) target = $region33
    $region32: #{forward.1} parent=1 // pred_region
      %59 = dma.done [#allocation3], 1024
    $region33: #{forward.1} parent=1 // pred_fallthru
      _
    // Predicated region
    $region34: #{forward.1} parent=1 // pred_check
      _
    $region35: #{forward.1} parent=1 // pred_check_branch
      %61 = sbr.rel (0) target = $region37
    $region36: #{forward.1} parent=1 // pred_region
      %62 = dma.done [#allocation6], 1024
    $region37: #{forward.1} parent=1 // pred_fallthru
      _
    // Predicated region
    $region38: #{forward.1} parent=1 // pred_check
      _
    $region39: #{forward.1} parent=1 // pred_check_branch
      %64 = sbr.rel (0) target = $region41
    $region40: #{forward.1} parent=1 // pred_region
      %65 = dma.done [#allocation6], 16
    $region41: #{forward.1} parent=1 // pred_fallthru
      _
    %v67 = vld [vmem:[%s0] sm:$0xff]
    %v68 = vld [vmem:[%s1] sm:$0xf]
    %v69 = vld [vmem:[%s1 + $0x4] sm:$0xf]
    %v70 = vld [vmem:[%s1 + $0x8] sm:$0xf]
    %v71 = vld [vmem:[%s1 + $0xc] sm:$0xf]
    %v72 = vld [vmem:[#allocation7] sm:$0x1]
    %v73 = vpack.c.bf16 %v67, %v67
    %v75 = vlaneseq
    %v76 = vshrl.u32 %v75, 7
    %v77 = vsub.s32 0, %v76
    %v78 = vrot.slane %v72, %v77
    %v84 = vunpack.c.l.b16 %v68
    %v85 = vunpack.c.l.b16 %v69
    %v86 = vunpack.c.l.b16 %v70
    %v87 = vunpack.c.l.b16 %v71
    %v88 = vpack.c.b16 %v85, %v84
    %v89 = vpack.c.b16 %v87, %v86
    %vm92 = vcmask 261120
    %v94 = vsel %vm92, %v73, 0
    %96 = vmatprep.subr.bf16.mxu0 0
    %97 = vmatpush1.bf16.msra.mxu0 %v88
    %98 = vmatprep.subr.bf16.mxu0 0
    %99 = vmatpush1.bf16.msra.mxu0 %v89
    %100 = vmatprep.subr.bf16.mxu0 0
    %101 = vmatpush1.bf16.msra.mxu0 0
    %102 = vmatprep.subr.bf16.mxu0 0
    %103 = vmatpush1.bf16.msra.mxu0 0
    %104 = vmatprep.subr.bf16.mxu0 0
    %105 = vmatpush1.bf16.msra.mxu0 0
    %106 = vmatprep.subr.bf16.mxu0 0
    %107 = vmatpush1.bf16.msra.mxu0 0
    %108 = vmatprep.subr.bf16.mxu0 0
    %109 = vmatpush1.bf16.msra.mxu0 0
    %110 = vmatprep.subr.bf16.mxu0 0
    %111 = vmatpush1.bf16.msra.mxu0 0
    %112 = vmatprep.subr.bf16.mxu0 0
    %113 = vmatpush1.bf16.msra.mxu0 0
    %114 = vmatprep.subr.bf16.mxu0 0
    %115 = vmatpush1.bf16.msra.mxu0 0
    %116 = vmatprep.subr.bf16.mxu0 0
    %117 = vmatpush1.bf16.msra.mxu0 0
    %118 = vmatprep.subr.bf16.mxu0 0
    %119 = vmatpush1.bf16.msra.mxu0 0
    %120 = vmatprep.subr.bf16.mxu0 0
    %121 = vmatpush1.bf16.msra.mxu0 0
    %122 = vmatprep.subr.bf16.mxu0 0
    %123 = vmatpush1.bf16.msra.mxu0 0
    %124 = vmatprep.subr.bf16.mxu0 0
    %125 = vmatpush1.bf16.msra.mxu0 0
    %126 = vmatprep.subr.bf16.mxu0 0
    %127 = vmatpush1.bf16.msra.mxu0 0
    %128 = vmatprep.mubr.bf16.mxu0 0
    %129 = vmatmul.mubr.bf16.gmra.mrb[0].mxu0 %v94
    %v130 = vpop.f32.mrb[0].mxu0
    %v131 = vadd.f32 %v78, %v130
    %v132 = vpop.f32.mrb[0].mxu0
    %v133 = vpop.f32.mrb[0].mxu0
    %v134 = vpop.f32.mrb[0].mxu0
    %135 = vdwg.mxu0
    %v136 = vmax.f32 %v131, 0.0
    %v137 = vld [vmem:[#allocation2] sm:$0xf]
    %v138 = vld [vmem:[#allocation2 + $0x4] sm:$0xf]
    %v139 = vld [vmem:[#allocation2 + $0x8] sm:$0xf]
    %v140 = vld [vmem:[#allocation2 + $0xc] sm:$0xf]
    %v141 = vld [vmem:[#allocation2 + $0x10] sm:$0xf]
    %v142 = vld [vmem:[#allocation2 + $0x14] sm:$0xf]
    %v143 = vld [vmem:[#allocation2 + $0x18] sm:$0xf]
    %v144 = vld [vmem:[#allocation2 + $0x1c] sm:$0xf]
    %v145 = vld [vmem:[#allocation2 + $0x20] sm:$0xf]
    %v146 = vld [vmem:[#allocation2 + $0x24] sm:$0xf]
    %v147 = vld [vmem:[#allocation2 + $0x28] sm:$0xf]
    %v148 = vld [vmem:[#allocation2 + $0x2c] sm:$0xf]
    %v149 = vld [vmem:[#allocation2 + $0x30] sm:$0xf]
    %v150 = vld [vmem:[#allocation2 + $0x34] sm:$0xf]
    %v151 = vld [vmem:[#allocation2 + $0x38] sm:$0xf]
    %v152 = vld [vmem:[#allocation2 + $0x3c] sm:$0xf]
    %v153 = vld [vmem:[%s5] sm:$0x1]
    %v154 = vpack.c.bf16 %v136, %v136
    %v156 = vlaneseq
    %v157 = vshrl.u32 %v156, 7
    %v158 = vsub.s32 0, %v157
    %v159 = vrot.slane %v153, %v158
    %v177 = vunpack.c.l.b16 %v137
    %v178 = vunpack.c.l.b16 %v138
    %v179 = vunpack.c.l.b16 %v139
    %v180 = vunpack.c.l.b16 %v140
    %v181 = vunpack.c.l.b16 %v141
    %v182 = vunpack.c.l.b16 %v142
    %v183 = vunpack.c.l.b16 %v143
    %v184 = vunpack.c.l.b16 %v144
    %v185 = vunpack.c.l.b16 %v145
    %v186 = vunpack.c.l.b16 %v146
    %v187 = vunpack.c.l.b16 %v147
    %v188 = vunpack.c.l.b16 %v148
    %v189 = vunpack.c.l.b16 %v149
    %v190 = vunpack.c.l.b16 %v150
    %v191 = vunpack.c.l.b16 %v151
    %v192 = vunpack.c.l.b16 %v152
    %v193 = vpack.c.b16 %v178, %v177
    %v194 = vpack.c.b16 %v180, %v179
    %v195 = vpack.c.b16 %v182, %v181
    %v196 = vpack.c.b16 %v184, %v183
    %v197 = vpack.c.b16 %v186, %v185
    %v198 = vpack.c.b16 %v188, %v187
    %v199 = vpack.c.b16 %v190, %v189
    %v200 = vpack.c.b16 %v192, %v191
    %209 = vmatprep.subr.bf16.mxu0 0
    %210 = vmatpush1.bf16.msra.mxu0 %v193
    %211 = vmatprep.subr.bf16.mxu0 0
    %212 = vmatpush1.bf16.msra.mxu0 %v194
    %213 = vmatprep.subr.bf16.mxu0 0
    %214 = vmatpush1.bf16.msra.mxu0 %v195
    %215 = vmatprep.subr.bf16.mxu0 0
    %216 = vmatpush1.bf16.msra.mxu0 %v196
    %217 = vmatprep.subr.bf16.mxu0 0
    %218 = vmatpush1.bf16.msra.mxu0 %v197
    %219 = vmatprep.subr.bf16.mxu0 0
    %220 = vmatpush1.bf16.msra.mxu0 %v198
    %221 = vmatprep.subr.bf16.mxu0 0
    %222 = vmatpush1.bf16.msra.mxu0 %v199
    %223 = vmatprep.subr.bf16.mxu0 0
    %224 = vmatpush1.bf16.msra.mxu0 %v200
    %225 = vmatprep.subr.bf16.mxu0 0
    %226 = vmatpush1.bf16.msra.mxu0 0
    %227 = vmatprep.subr.bf16.mxu0 0
    %228 = vmatpush1.bf16.msra.mxu0 0
    %229 = vmatprep.subr.bf16.mxu0 0
    %230 = vmatpush1.bf16.msra.mxu0 0
    %231 = vmatprep.subr.bf16.mxu0 0
    %232 = vmatpush1.bf16.msra.mxu0 0
    %233 = vmatprep.subr.bf16.mxu0 0
    %234 = vmatpush1.bf16.msra.mxu0 0
    %235 = vmatprep.subr.bf16.mxu0 0
    %236 = vmatpush1.bf16.msra.mxu0 0
    %237 = vmatprep.subr.bf16.mxu0 0
    %238 = vmatpush1.bf16.msra.mxu0 0
    %239 = vmatprep.subr.bf16.mxu0 0
    %240 = vmatpush1.bf16.msra.mxu0 0
    %241 = vmatprep.mubr.bf16.mxu0 0
    %242 = vmatmul.mubr.bf16.gmra.mrb[0].mxu0 %v154
    %v243 = vpop.f32.mrb[0].mxu0
    %v244 = vadd.f32 %v159, %v243
    %v245 = vpop.f32.mrb[0].mxu0
    %v246 = vpop.f32.mrb[0].mxu0
    %v247 = vpop.f32.mrb[0].mxu0
    %248 = vdwg.mxu0
    %v249 = vmax.f32 %v244, 0.0
    %v250 = vld [vmem:[#allocation5] sm:$0xf]
    %v251 = vld [vmem:[#allocation5 + $0x4] sm:$0xf]
    %v252 = vld [vmem:[#allocation5 + $0x8] sm:$0xf]
    %v253 = vld [vmem:[#allocation5 + $0xc] sm:$0xf]
    %v254 = vld [vmem:[#allocation5 + $0x10] sm:$0xf]
    %v255 = vld [vmem:[#allocation5 + $0x14] sm:$0xf]
    %v256 = vld [vmem:[#allocation5 + $0x18] sm:$0xf]
    %v257 = vld [vmem:[#allocation5 + $0x1c] sm:$0xf]
    %v258 = vld [vmem:[#allocation5 + $0x20] sm:$0xf]
    %v259 = vld [vmem:[#allocation5 + $0x24] sm:$0xf]
    %v260 = vld [vmem:[#allocation5 + $0x28] sm:$0xf]
    %v261 = vld [vmem:[#allocation5 + $0x2c] sm:$0xf]
    %v262 = vld [vmem:[#allocation5 + $0x30] sm:$0xf]
    %v263 = vld [vmem:[#allocation5 + $0x34] sm:$0xf]
    %v264 = vld [vmem:[#allocation5 + $0x38] sm:$0xf]
    %v265 = vld [vmem:[#allocation5 + $0x3c] sm:$0xf]
    %v266 = vld [vmem:[%s6] sm:$0x1]
    %v267 = vpack.c.bf16 %v249, %v249
    %v269 = vlaneseq
    %v270 = vshrl.u32 %v269, 7
    %v271 = vsub.s32 0, %v270
    %v272 = vrot.slane %v266, %v271
    %v290 = vunpack.c.l.b16 %v250
    %v291 = vunpack.c.l.b16 %v251
    %v292 = vunpack.c.l.b16 %v252
    %v293 = vunpack.c.l.b16 %v253
    %v294 = vunpack.c.l.b16 %v254
    %v295 = vunpack.c.l.b16 %v255
    %v296 = vunpack.c.l.b16 %v256
    %v297 = vunpack.c.l.b16 %v257
    %v298 = vunpack.c.l.b16 %v258
    %v299 = vunpack.c.l.b16 %v259
    %v300 = vunpack.c.l.b16 %v260
    %v301 = vunpack.c.l.b16 %v261
    %v302 = vunpack.c.l.b16 %v262
    %v303 = vunpack.c.l.b16 %v263
    %v304 = vunpack.c.l.b16 %v264
    %v305 = vunpack.c.l.b16 %v265
    %v306 = vpack.c.b16 %v291, %v290
    %v307 = vpack.c.b16 %v293, %v292
    %v308 = vpack.c.b16 %v295, %v294
    %v309 = vpack.c.b16 %v297, %v296
    %v310 = vpack.c.b16 %v299, %v298
    %v311 = vpack.c.b16 %v301, %v300
    %v312 = vpack.c.b16 %v303, %v302
    %v313 = vpack.c.b16 %v305, %v304
    %322 = vmatprep.subr.bf16.mxu0 0
    %323 = vmatpush1.bf16.msra.mxu0 %v306
    %324 = vmatprep.subr.bf16.mxu0 0
    %325 = vmatpush1.bf16.msra.mxu0 %v307
    %326 = vmatprep.subr.bf16.mxu0 0
    %327 = vmatpush1.bf16.msra.mxu0 %v308
    %328 = vmatprep.subr.bf16.mxu0 0
    %329 = vmatpush1.bf16.msra.mxu0 %v309
    %330 = vmatprep.subr.bf16.mxu0 0
    %331 = vmatpush1.bf16.msra.mxu0 %v310
    %332 = vmatprep.subr.bf16.mxu0 0
    %333 = vmatpush1.bf16.msra.mxu0 %v311
    %334 = vmatprep.subr.bf16.mxu0 0
    %335 = vmatpush1.bf16.msra.mxu0 %v312
    %336 = vmatprep.subr.bf16.mxu0 0
    %337 = vmatpush1.bf16.msra.mxu0 %v313
    %338 = vmatprep.subr.bf16.mxu0 0
    %339 = vmatpush1.bf16.msra.mxu0 0
    %340 = vmatprep.subr.bf16.mxu0 0
    %341 = vmatpush1.bf16.msra.mxu0 0
    %342 = vmatprep.subr.bf16.mxu0 0
    %343 = vmatpush1.bf16.msra.mxu0 0
    %344 = vmatprep.subr.bf16.mxu0 0
    %345 = vmatpush1.bf16.msra.mxu0 0
    %346 = vmatprep.subr.bf16.mxu0 0
    %347 = vmatpush1.bf16.msra.mxu0 0
    %348 = vmatprep.subr.bf16.mxu0 0
    %349 = vmatpush1.bf16.msra.mxu0 0
    %350 = vmatprep.subr.bf16.mxu0 0
    %351 = vmatpush1.bf16.msra.mxu0 0
    %352 = vmatprep.subr.bf16.mxu0 0
    %353 = vmatpush1.bf16.msra.mxu0 0
    %354 = vmatprep.mubr.bf16.mxu0 0
    %355 = vmatmul.mubr.bf16.gmra.mrb[0].mxu0 %v267
    %v356 = vpop.f32.mrb[0].mxu0
    %v357 = vadd.f32 %v272, %v356
    %v358 = vpop.f32.mrb[0].mxu0
    %v359 = vpop.f32.mrb[0].mxu0
    %v360 = vpop.f32.mrb[0].mxu0
    %361 = vdwg.mxu0
    %v362 = vmax.f32 %v357, 0.0
    %363 = vst [vmem:[#allocation8] sm:$0xff] %v362
    // Predicated region
    $region42: #{forward.1} parent=1 // pred_check
      _
    $region43: #{forward.1} parent=1 // pred_check_branch
      %365 = sbr.rel (0) target = $region45
    $region44: #{forward.1} parent=1 // pred_region
      %s367 = ssub.s32 128, 128
      %368 = vsyncadd [#allocation4], %s367
      %s370 = sshll.u32 [#allocation8], 4
      %s371 = int_to_ptr.vmem [resolvable:$true] %s370
      %373 = dma.vmem_to_hbm [thread:$0]  %s371, 128, %s7, [#allocation4]
    $region45: #{forward.1} parent=1 // pred_fallthru
      _
    // Predicated region
    $region46: #{forward.1} parent=1 // pred_check
      _
    $region47: #{forward.1} parent=1 // pred_check_branch
      %375 = sbr.rel (0) target = $region49
    $region48: #{forward.1} parent=1 // pred_region
      %376 = dma.done [#allocation4], 128
    $region49: #{forward.1} parent=1 // pred_fallthru
      _
    %377 = vsyncpa [#allocation3], 1
    %378 = vsyncpa [#allocation6], 1
    %379 = vsyncpa [#allocation4], 1

</llo_original>
